<compile_context>
chip_gen: v7x
topology: tpu7x:2x2x1
jax: 0.10.0
libtpu: 0.0.40
codegen_flags: <defaults>
</compile_context>

<pallas_src>
import functools

import jax
import jax.numpy as jnp
from jax.experimental import pallas as pl
from jax.experimental.pallas import tpu as pltpu


# ----------------------------- Pallas kernel ------------------------------

def _rowconv_kernel(*refs, term_offsets, has_res, relu, row_tiled):
    """out = [relu]( sum_terms sum_kh X2[i0+off_kh] @ T[kh] + bias [+ res] ).

    refs: (x2_0, w_0, [x2_1, w_1, ...], bias, [res], out)
      x2_i : (R_i, L_i)        bf16  row-layout activation (whole image, resident)
      w_i  : (KH_i, L_i, Nout) bf16  block-Toeplitz weight slabs (BN scale folded)
      bias : (1, Nout)         f32
      res  : (th, Nout)        bf16  identity residual tile (optional)
      out  : (th, Nout)
    """
    out_ref = refs[-1]
    th = out_ref.shape[0]
    i0 = pl.program_id(1) * th if row_tiled else 0   # static (0) when one row tile

    acc = None
    for i, offs in enumerate(term_offsets):
        x_ref = refs[2 * i]
        w_ref = refs[2 * i + 1]
        for kh, off in enumerate(offs):
            lhs = x_ref[pl.ds(i0 + off, th), :]                  # (th, L_i) bf16
            part = jnp.dot(lhs, w_ref[kh],
                           preferred_element_type=jnp.float32)   # MXU, f32 acc
            acc = part if acc is None else acc + part

    pos = 2 * len(term_offsets)
    acc = acc + refs[pos][...]                      # folded-BN bias (1, Nout) f32
    pos += 1
    if has_res:
        acc = acc + refs[pos][...].astype(jnp.float32)
    if relu:
        acc = jnp.maximum(acc, 0.0)
    out_ref[...] = acc.astype(out_ref.dtype)


# ------------------------------- JAX glue ---------------------------------

def _pick_row_tile(ho):
    """Output-row tile: must divide ho and be a multiple of 8 (or equal ho)."""
    if ho <= 8 or ho % 8 != 0:
        return ho
    for cand in (64, 32, 16, 8):
        if ho % cand == 0:
            return cand
    return ho


def fused_row_conv(terms, bias_row, *, ho, relu, residual=None,
                   out_dtype=jnp.bfloat16):
    """[relu]( sum_i rowconv(X2_i, T_i) + bias [+ residual] ) over a batch.

    terms: list of (x2 (N, R_i, L_i), row-offset tuple, T (KH_i, L_i, Nout) f32).
    Returns (N, ho, Nout) in out_dtype.  Inputs go to bf16; accumulation is f32.
    """
    n = terms[0][0].shape[0]
    nout = terms[0][2].shape[-1]
    th = _pick_row_tile(ho)
    n_row_tiles = ho // th
    grid = (n, n_row_tiles)

    def build(use_buffered):
        # Grid-invariant inputs (weights, bias) get single buffering to halve
        # their VMEM footprint (matters at real ResNet widths / v7x 64 MiB).
        resident = dict(pipeline_mode=pl.Buffered(1)) if use_buffered else {}

        args, in_specs = [], []
        flops, nbytes = 0, 0
        for x2, offs, tmat in terms:
            x2 = x2.astype(jnp.bfloat16)
            r, l = x2.shape[1], x2.shape[2]
            args.append(x2)
            in_specs.append(pl.BlockSpec((None, r, l), lambda i, t: (i, 0, 0)))
            w = tmat.astype(jnp.bfloat16)
            args.append(w)
            in_specs.append(pl.BlockSpec((len(offs), l, nout),
                                         lambda i, t: (0, 0, 0), **resident))
            flops += 2 * n * ho * l * nout * len(offs)
            nbytes += x2.size * 2 + w.size * 2

        args.append(bias_row.reshape(1, nout).astype(jnp.float32))
        in_specs.append(pl.BlockSpec((1, nout), lambda i, t: (0, 0), **resident))
        nbytes += nout * 4

        if residual is not None:
            res = residual.astype(jnp.bfloat16)
            args.append(res)
            in_specs.append(pl.BlockSpec((None, th, nout), lambda i, t: (i, t, 0)))
            nbytes += res.size * 2
        nbytes += n * ho * nout * (2 if out_dtype == jnp.bfloat16 else 4)

        kernel = functools.partial(
            _rowconv_kernel,
            term_offsets=tuple(offs for _, offs, _ in terms),
            has_res=residual is not None, relu=relu,
            row_tiled=n_row_tiles > 1)

        return pl.pallas_call(
            kernel,
            out_shape=jax.ShapeDtypeStruct((n, ho, nout), out_dtype),
            grid=grid,
            in_specs=in_specs,
            out_specs=pl.BlockSpec((None, th, nout), lambda i, t: (i, t, 0)),
            compiler_params=pltpu.CompilerParams(
                dimension_semantics=("parallel", "parallel"),
                vmem_limit_bytes=32 * 1024 * 1024),
            cost_estimate=pl.CostEstimate(
                flops=flops, transcendentals=0, bytes_accessed=nbytes),
        )(*args)

    try:
        return build(use_buffered=True)
    except Exception:   # pipeline_mode / Buffered(1) unsupported on this build
        return build(use_buffered=False)


def fold_bn(gamma, beta, running_mean, running_var, eps=1e-5):
    scale = gamma / jnp.sqrt(running_var + eps)
    bias = beta - running_mean * scale
    return scale, bias


def _conv3x3_toeplitz(w_oihw, scale, wp, wo, stride):
    """3x3 / pad-1 conv as row-matmul slabs vs. the row-layout padded input.

    Row layout of the padded activation X2 (per image):
      stride 1: X2[r, w*cin + c]            = x_pad[r, w, c]
      stride 2: X2[r, p*wp*cin + w*cin + c] = x_pad[2r + p, w, c]
    Returns (offsets, T) with T[kh] of shape (L, wo*cout) such that
      out_row[i] = sum_kh X2[i + offsets[kh]] @ T[kh].
    """
    cout, cin = w_oihw.shape[0], w_oihw.shape[1]
    w = jnp.transpose(w_oihw, (2, 3, 1, 0)).astype(jnp.float32)
    w = w * scale.reshape(1, 1, 1, cout)                      # (3, 3, cin, cout)
    j = jnp.arange(wo)
    if stride == 1:
        blocks = jnp.zeros((3, wp, wo, cin, cout), jnp.float32)
        for dh in range(3):
            for dw in range(3):
                blocks = blocks.at[dh, j + dw, j].set(w[dh, dw])
        t = blocks.transpose(0, 1, 3, 2, 4).reshape(3, wp * cin, wo * cout)
        return (0, 1, 2), t
    # stride 2: rows are paired; padded row 2i+dh lives in paired row i + dh//2.
    blocks = jnp.zeros((2, 2, wp, wo, cin, cout), jnp.float32)
    for dh in range(3):
        kh, p = dh // 2, dh % 2
        for dw in range(3):
            blocks = blocks.at[kh, p, 2 * j + dw, j].set(w[dh, dw])
    t = blocks.transpose(0, 1, 2, 4, 3, 5).reshape(2, 2 * wp * cin, wo * cout)
    return (0, 1), t


def _conv1x1_toeplitz(w_oihw, scale, wp, wo, stride, cin):
    """1x1 / stride-s shortcut conv expressed against conv1's row layout."""
    cout = w_oihw.shape[0]
    wmat = w_oihw.reshape(cout, cin).T.astype(jnp.float32) * scale.reshape(1, cout)
    j = jnp.arange(wo)
    if stride == 1:
        # out[i, j] <- x_pad[i + 1, j + 1]
        blocks = jnp.zeros((wp, wo, cin, cout), jnp.float32)
        blocks = blocks.at[j + 1, j].set(wmat)
        t = blocks.transpose(0, 2, 1, 3).reshape(1, wp * cin, wo * cout)
        return (1,), t
    # stride 2: out[i, j] <- x_pad[2i + 1, 2j + 1]  (paired row i, parity 1)
    blocks = jnp.zeros((2, wp, wo, cin, cout), jnp.float32)
    blocks = blocks.at[1, 2 * j + 1, j].set(wmat)
    t = blocks.transpose(0, 1, 3, 2, 4).reshape(1, 2 * wp * cin, wo * cout)
    return (0,), t


# --------------------------- BasicBlock module ----------------------------

def init_basic_block(key, in_planes, planes, stride):
    ks = jax.random.split(key, 8)
    p = {
        "w1": 0.1 * jax.random.normal(ks[0], (planes, in_planes, 3, 3), jnp.float32),
        "bn1": (1.0 + 0.1 * jax.random.normal(ks[1], (planes,), jnp.float32),
                0.1 * jax.random.normal(ks[2], (planes,), jnp.float32),
                jnp.zeros((planes,), jnp.float32),
                jnp.ones((planes,), jnp.float32)),
        "w2": 0.1 * jax.random.normal(ks[3], (planes, planes, 3, 3), jnp.float32),
        "bn2": (1.0 + 0.1 * jax.random.normal(ks[4], (planes,), jnp.float32),
                0.1 * jax.random.normal(ks[5], (planes,), jnp.float32),
                jnp.zeros((planes,), jnp.float32),
                jnp.ones((planes,), jnp.float32)),
        "has_shortcut": (stride != 1) or (in_planes != planes),
    }
    if p["has_shortcut"]:
        p["wsc"] = 0.1 * jax.random.normal(ks[6], (planes, in_planes, 1, 1), jnp.float32)
        p["bnsc"] = (1.0 + 0.1 * jax.random.normal(ks[7], (planes,), jnp.float32),
                     jnp.zeros((planes,), jnp.float32),
                     jnp.zeros((planes,), jnp.float32),
                     jnp.ones((planes,), jnp.float32))
    return p


def basic_block_forward_nhwc(x_nhwc, params, stride):
    """x_nhwc: (N, H, W, Cin) bf16 NHWC  ->  (N, Ho, Wo, planes) bf16 NHWC."""
    n, h, w, cin = x_nhwc.shape
    planes = params["w1"].shape[0]
    ho = (h - 1) // stride + 1
    wo = (w - 1) // stride + 1
    wp = w + 2

    x_pad = jnp.pad(x_nhwc, ((0, 0), (1, 1), (1, 1), (0, 0)))
    if stride == 1:
        x2_1 = x_pad.reshape(n, h + 2, wp * cin)
    else:
        assert (h + 2) % 2 == 0, "stride-2 path assumes an even padded height"
        x2_1 = x_pad.reshape(n, (h + 2) // 2, 2 * wp * cin)   # paired rows, free reshape

    # conv1 + bn1 + ReLU
    s1, b1 = fold_bn(*params["bn1"])
    offs1, t1 = _conv3x3_toeplitz(params["w1"], s1, wp, wo, stride)
    out1 = fused_row_conv([(x2_1, offs1, t1)], jnp.tile(b1, wo), ho=ho,
                          relu=True, out_dtype=jnp.bfloat16)      # (n, ho, wo*planes)

    # conv2 + bn2 (+ shortcut conv + bn | identity residual) + add + ReLU
    s2, b2 = fold_bn(*params["bn2"])
    out1_pad = jnp.pad(out1.reshape(n, ho, wo, planes),
                       ((0, 0), (1, 1), (1, 1), (0, 0)))
    x2_2 = out1_pad.reshape(n, ho + 2, (wo + 2) * planes)
    offs2, t2 = _conv3x3_toeplitz(params["w2"], s2, wo + 2, wo, 1)
    terms = [(x2_2, offs2, t2)]
    bias = jnp.tile(b2, wo)
    residual = None
    if params["has_shortcut"]:
        ssc, bsc = fold_bn(*params["bnsc"])
        offs_sc, tsc = _conv1x1_toeplitz(params["wsc"], ssc, wp, wo, stride, cin)
        terms.append((x2_1, offs_sc, tsc))    # re-uses conv1's row-layout input
        bias = bias + jnp.tile(bsc, wo)
    else:
        residual = x_nhwc.reshape(n, h, w * cin)   # identity: h==ho, w*cin==wo*planes

    out = fused_row_conv(terms, bias, ho=ho, relu=True,
                         residual=residual, out_dtype=jnp.bfloat16)
    return out.reshape(n, ho, wo, planes)


def nchw_to_nhwc_bf16(x_nchw):
    return jnp.transpose(x_nchw, (0, 2, 3, 1)).astype(jnp.bfloat16)


def nhwc_to_nchw_f32(x_nhwc):
    return jnp.transpose(x_nhwc, (0, 3, 1, 2)).astype(jnp.float32)


def basic_block_forward(x_nchw, params, stride):
    """NCHW f32 convenience wrapper (chain blocks via the NHWC bf16 version)."""
    return nhwc_to_nchw_f32(
        basic_block_forward_nhwc(nchw_to_nhwc_bf16(x_nchw), params, stride))


# ------------------------- Pure-JAX reference -----------------------------

def _ref_conv(x_nchw, w, stride, pad):
    return jax.lax.conv_general_dilated(
        x_nchw, w, (stride, stride), ((pad, pad), (pad, pad)),
        dimension_numbers=("NCHW", "OIHW", "NCHW"))


def _ref_bn(y, gamma, beta, mean, var, eps=1e-5):
    r = lambda v: v.reshape(1, -1, 1, 1)
    return (y - r(mean)) / jnp.sqrt(r(var) + eps) * r(gamma) + r(beta)


def ref_forward(x, params, stride):
    out = jax.nn.relu(_ref_bn(_ref_conv(x, params["w1"], stride, 1), *params["bn1"]))
    out = _ref_bn(_ref_conv(out, params["w2"], 1, 1), *params["bn2"])
    if params["has_shortcut"]:
        sc = _ref_bn(_ref_conv(x, params["wsc"], stride, 0), *params["bnsc"])
    else:
        sc = x
    return jax.nn.relu(out + sc)


# --------------------------------- main ------------------------------------

if __name__ == "__main__":
    key = jax.random.PRNGKey(0)
    kx, kpa, kpb = jax.random.split(key, 3)

    N, Cin, H, W = 2, 4, 16, 16
    planes, stride = 8, 2

    x = jax.random.normal(kx, (N, Cin, H, W), jnp.float32)

    params_a = init_basic_block(kpa, Cin, planes, stride)   # shortcut-conv block
    params_b = init_basic_block(kpb, planes, planes, 1)     # identity block

    # Chain the two blocks in bf16 NHWC; convert only at the ends of the chain.
    x_nhwc = nchw_to_nhwc_bf16(x)
    out_a_nhwc = basic_block_forward_nhwc(x_nhwc, params_a, stride)
    out_b_nhwc = basic_block_forward_nhwc(out_a_nhwc, params_b, 1)

    out_a = jax.block_until_ready(nhwc_to_nchw_f32(out_a_nhwc))
    out_b = jax.block_until_ready(nhwc_to_nchw_f32(out_b_nhwc))

    # Block A: downsampling block -> shortcut conv branch active.
    assert out_a.shape == (N, planes, H // stride, W // stride)
    ref_a = ref_forward(x, params_a, stride)
    err_a = float(jnp.max(jnp.abs(out_a - ref_a)))
    assert jnp.allclose(out_a, ref_a, atol=5e-2, rtol=5e-2), err_a

    # Block B: identity-shortcut block (stride=1, planes -> planes).
    assert out_b.shape == out_a.shape
    ref_b = ref_forward(out_a, params_b, 1)
    err_b = float(jnp.max(jnp.abs(out_b - ref_b)))
    assert jnp.allclose(out_b, ref_b, atol=5e-2, rtol=5e-2), err_b

    print("KERNEL_OK")
</pallas_src>

<mosaic_0001>
module attributes {stable_mosaic.version = 11 : i64} {
  func.func @_rowconv_kernel(%arg0: i32, %arg1: i32, %arg2: memref<1x9x144xbf16, #tpu.memory_space<vmem>>, %arg3: memref<2x144x64xbf16, #tpu.memory_space<vmem>>, %arg4: memref<1x64xf32, #tpu.memory_space<vmem>>, %arg5: memref<1x8x64xbf16, #tpu.memory_space<vmem>>) attributes {dimension_semantics = [#tpu.dimension_semantics<parallel>, #tpu.dimension_semantics<parallel>], iteration_bounds = array<i64: 2, 1>, scalar_prefetch = 0 : i64, scratch_operands = 0 : i64, tpu.core_type = #tpu.core_type<tc>, window_params = [{transform_indices = @transform_0, window_bounds = array<i64: 1, 9, 144>}, {pipeline_mode = #tpu.pipeline_mode<synchronous>, transform_indices = @transform_1, window_bounds = array<i64: 2, 144, 64>}, {pipeline_mode = #tpu.pipeline_mode<synchronous>, transform_indices = @transform_2, window_bounds = array<i64: 1, 64>}, {transform_indices = @transform_3, window_bounds = array<i64: 1, 8, 64>}]} {
    %c0 = arith.constant 0 : index
    %c0_0 = arith.constant 0 : index
    %c0_1 = arith.constant 0 : index
    %0 = vector.load %arg2[%c0, %c0_0, %c0_1] : memref<1x9x144xbf16, #tpu.memory_space<vmem>>, vector<1x8x144xbf16>
    %1 = vector.shape_cast %0 : vector<1x8x144xbf16> to vector<8x144xbf16>
    %c0_2 = arith.constant 0 : index
    %c0_3 = arith.constant 0 : index
    %c0_4 = arith.constant 0 : index
    %2 = vector.load %arg3[%c0_2, %c0_3, %c0_4] : memref<2x144x64xbf16, #tpu.memory_space<vmem>>, vector<1x144x64xbf16>
    %3 = vector.shape_cast %2 : vector<1x144x64xbf16> to vector<144x64xbf16>
    %cst = arith.constant dense<0.000000e+00> : vector<8x64xf32>
    %4 = tpu.matmul %1, %3, %cst {dimension_numbers = #tpu.dot_dimension_numbers<[1], [0], [0], [1], [0, 0, 1, 1], [], []>} : vector<8x144xbf16>, vector<144x64xbf16>, vector<8x64xf32> -> vector<8x64xf32>
    %c0_5 = arith.constant 0 : index
    %c1 = arith.constant 1 : index
    %c0_6 = arith.constant 0 : index
    %5 = vector.load %arg2[%c0_5, %c1, %c0_6] : memref<1x9x144xbf16, #tpu.memory_space<vmem>>, vector<1x8x144xbf16>
    %6 = vector.shape_cast %5 : vector<1x8x144xbf16> to vector<8x144xbf16>
    %c1_7 = arith.constant 1 : index
    %c0_8 = arith.constant 0 : index
    %c0_9 = arith.constant 0 : index
    %7 = vector.load %arg3[%c1_7, %c0_8, %c0_9] : memref<2x144x64xbf16, #tpu.memory_space<vmem>>, vector<1x144x64xbf16>
    %8 = vector.shape_cast %7 : vector<1x144x64xbf16> to vector<144x64xbf16>
    %cst_10 = arith.constant dense<0.000000e+00> : vector<8x64xf32>
    %9 = tpu.matmul %6, %8, %cst_10 {dimension_numbers = #tpu.dot_dimension_numbers<[1], [0], [0], [1], [0, 0, 1, 1], [], []>} : vector<8x144xbf16>, vector<144x64xbf16>, vector<8x64xf32> -> vector<8x64xf32>
    %10 = arith.addf %4, %9 : vector<8x64xf32>
    %c0_11 = arith.constant 0 : index
    %c0_12 = arith.constant 0 : index
    %11 = vector.load %arg4[%c0_11, %c0_12] : memref<1x64xf32, #tpu.memory_space<vmem>>, vector<1x64xf32>
    %12 = vector.broadcast %11 : vector<1x64xf32> to vector<8x64xf32>
    %13 = arith.addf %10, %12 : vector<8x64xf32>
    %cst_13 = arith.constant 0.000000e+00 : f32
    %14 = vector.broadcast %cst_13 : f32 to vector<8x64xf32>
    %15 = arith.maximumf %13, %14 : vector<8x64xf32>
    %16 = arith.truncf %15 : vector<8x64xf32> to vector<8x64xbf16>
    %c0_14 = arith.constant 0 : index
    %c0_15 = arith.constant 0 : index
    %c0_16 = arith.constant 0 : index
    %17 = vector.load %arg5[%c0_14, %c0_15, %c0_16] : memref<1x8x64xbf16, #tpu.memory_space<vmem>>, vector<1x8x64xbf16>
    %18 = vector.shape_cast %17 : vector<1x8x64xbf16> to vector<8x64xbf16>
    %19 = vector.shape_cast %16 : vector<8x64xbf16> to vector<1x8x64xbf16>
    tpu.vector_store %arg5[%c0_14, %c0_15, %c0_16], %19 {strides = array<i32>} : memref<1x8x64xbf16, #tpu.memory_space<vmem>>, vector<1x8x64xbf16>,
    return
  }
  func.func @transform_0(%arg0: i32, %arg1: i32) -> (i32, i32, i32) {
    %c0_i32 = arith.constant 0 : i32
    %c0_i32_0 = arith.constant 0 : i32
    %c0_i32_1 = arith.constant 0 : i32
    return %arg0, %c0_i32, %c0_i32_0 : i32, i32, i32
  }
  func.func @transform_1(%arg0: i32, %arg1: i32) -> (i32, i32, i32) {
    %c0_i32 = arith.constant 0 : i32
    %c0_i32_0 = arith.constant 0 : i32
    %c0_i32_1 = arith.constant 0 : i32
    %c0_i32_2 = arith.constant 0 : i32
    return %c0_i32, %c0_i32_0, %c0_i32_1 : i32, i32, i32
  }
  func.func @transform_2(%arg0: i32, %arg1: i32) -> (i32, i32) {
    %c0_i32 = arith.constant 0 : i32
    %c0_i32_0 = arith.constant 0 : i32
    %c0_i32_1 = arith.constant 0 : i32
    return %c0_i32, %c0_i32_0 : i32, i32
  }
  func.func @transform_3(%arg0: i32, %arg1: i32) -> (i32, i32, i32) {
    %c0_i32 = arith.constant 0 : i32
    %c0_i32_0 = arith.constant 0 : i32
    return %arg0, %arg1, %c0_i32 : i32, i32, i32
  }
}

module attributes {stable_mosaic.version = 11 : i64} {
  func.func @_rowconv_kernel(%arg0: i32, %arg1: i32, %arg2: memref<1x9x144xbf16, #tpu.memory_space<vmem>>, %arg3: memref<2x144x64xbf16, #tpu.memory_space<vmem>>, %arg4: memref<1x64xf32, #tpu.memory_space<vmem>>, %arg5: memref<1x8x64xbf16, #tpu.memory_space<vmem>>) attributes {dimension_semantics = [#tpu.dimension_semantics<parallel>, #tpu.dimension_semantics<parallel>], iteration_bounds = array<i64: 2, 1>, scalar_prefetch = 0 : i64, scratch_operands = 0 : i64, tpu.core_type = #tpu.core_type<tc>, window_params = [{transform_indices = @transform_0, window_bounds = array<i64: 1, 9, 144>}, {pipeline_mode = #tpu.pipeline_mode<synchronous>, transform_indices = @transform_1, window_bounds = array<i64: 2, 144, 64>}, {pipeline_mode = #tpu.pipeline_mode<synchronous>, transform_indices = @transform_2, window_bounds = array<i64: 1, 64>}, {transform_indices = @transform_3, window_bounds = array<i64: 1, 8, 64>}]} {
    %c0 = arith.constant 0 : index
    %c0_0 = arith.constant 0 : index
    %c0_1 = arith.constant 0 : index
    %0 = vector.load %arg2[%c0, %c0_0, %c0_1] : memref<1x9x144xbf16, #tpu.memory_space<vmem>>, vector<1x8x144xbf16>
    %1 = vector.shape_cast %0 : vector<1x8x144xbf16> to vector<8x144xbf16>
    %c0_2 = arith.constant 0 : index
    %c0_3 = arith.constant 0 : index
    %c0_4 = arith.constant 0 : index
    %2 = vector.load %arg3[%c0_2, %c0_3, %c0_4] : memref<2x144x64xbf16, #tpu.memory_space<vmem>>, vector<1x144x64xbf16>
    %3 = vector.shape_cast %2 : vector<1x144x64xbf16> to vector<144x64xbf16>
    %cst = arith.constant dense<0.000000e+00> : vector<8x64xf32>
    %4 = tpu.matmul %1, %3, %cst {dimension_numbers = #tpu.dot_dimension_numbers<[1], [0], [0], [1], [0, 0, 1, 1], [], []>} : vector<8x144xbf16>, vector<144x64xbf16>, vector<8x64xf32> -> vector<8x64xf32>
    %c0_5 = arith.constant 0 : index
    %c1 = arith.constant 1 : index
    %c0_6 = arith.constant 0 : index
    %5 = vector.load %arg2[%c0_5, %c1, %c0_6] : memref<1x9x144xbf16, #tpu.memory_space<vmem>>, vector<1x8x144xbf16>
    %6 = vector.shape_cast %5 : vector<1x8x144xbf16> to vector<8x144xbf16>
    %c1_7 = arith.constant 1 : index
    %c0_8 = arith.constant 0 : index
    %c0_9 = arith.constant 0 : index
    %7 = vector.load %arg3[%c1_7, %c0_8, %c0_9] : memref<2x144x64xbf16, #tpu.memory_space<vmem>>, vector<1x144x64xbf16>
    %8 = vector.shape_cast %7 : vector<1x144x64xbf16> to vector<144x64xbf16>
    %cst_10 = arith.constant dense<0.000000e+00> : vector<8x64xf32>
    %9 = tpu.matmul %6, %8, %cst_10 {dimension_numbers = #tpu.dot_dimension_numbers<[1], [0], [0], [1], [0, 0, 1, 1], [], []>} : vector<8x144xbf16>, vector<144x64xbf16>, vector<8x64xf32> -> vector<8x64xf32>
    %10 = arith.addf %4, %9 : vector<8x64xf32>
    %c0_11 = arith.constant 0 : index
    %c0_12 = arith.constant 0 : index
    %11 = vector.load %arg4[%c0_11, %c0_12] : memref<1x64xf32, #tpu.memory_space<vmem>>, vector<1x64xf32>
    %12 = vector.broadcast %11 : vector<1x64xf32> to vector<8x64xf32>
    %13 = arith.addf %10, %12 : vector<8x64xf32>
    %cst_13 = arith.constant 0.000000e+00 : f32
    %14 = vector.broadcast %cst_13 : f32 to vector<8x64xf32>
    %15 = arith.maximumf %13, %14 : vector<8x64xf32>
    %16 = arith.truncf %15 : vector<8x64xf32> to vector<8x64xbf16>
    %c0_14 = arith.constant 0 : index
    %c0_15 = arith.constant 0 : index
    %c0_16 = arith.constant 0 : index
    %17 = vector.load %arg5[%c0_14, %c0_15, %c0_16] : memref<1x8x64xbf16, #tpu.memory_space<vmem>>, vector<1x8x64xbf16>
    %18 = vector.shape_cast %17 : vector<1x8x64xbf16> to vector<8x64xbf16>
    %19 = vector.shape_cast %16 : vector<8x64xbf16> to vector<1x8x64xbf16>
    tpu.vector_store %arg5[%c0_14, %c0_15, %c0_16], %19 {strides = array<i32>} : memref<1x8x64xbf16, #tpu.memory_space<vmem>>, vector<1x8x64xbf16>,
    return
  }
  func.func @transform_0(%arg0: i32, %arg1: i32) -> (i32, i32, i32) {
    %c0_i32 = arith.constant 0 : i32
    %c0_i32_0 = arith.constant 0 : i32
    %c0_i32_1 = arith.constant 0 : i32
    return %arg0, %c0_i32, %c0_i32_0 : i32, i32, i32
  }
  func.func @transform_1(%arg0: i32, %arg1: i32) -> (i32, i32, i32) {
    %c0_i32 = arith.constant 0 : i32
    %c0_i32_0 = arith.constant 0 : i32
    %c0_i32_1 = arith.constant 0 : i32
    %c0_i32_2 = arith.constant 0 : i32
    return %c0_i32, %c0_i32_0, %c0_i32_1 : i32, i32, i32
  }
  func.func @transform_2(%arg0: i32, %arg1: i32) -> (i32, i32) {
    %c0_i32 = arith.constant 0 : i32
    %c0_i32_0 = arith.constant 0 : i32
    %c0_i32_1 = arith.constant 0 : i32
    return %c0_i32, %c0_i32_0 : i32, i32
  }
  func.func @transform_3(%arg0: i32, %arg1: i32) -> (i32, i32, i32) {
    %c0_i32 = arith.constant 0 : i32
    %c0_i32_0 = arith.constant 0 : i32
    return %arg0, %arg1, %c0_i32 : i32, i32, i32
  }
}

</mosaic_0001>

<llo_original>
// kernel: tpu_custom_call.1
$region0: #{tpu_custom_call.1}
  #allocation0 [shape = 'u32[]', space=smem, size = 0x4, offset = 0x4, fixed_abs, tag = 'smem constant byte address 0x4 - core index']
  #allocation1 [shape = 'u32[144,128]{1,0:T(1,128)}', space=vmem, size = 0x12000, scoped, tag = 'internal scratch']
  %s0 = inlined_call_operand.vmem [shape: bf16[2,9,144], index: 0, kind: input, shape index: {}]
  %s1 = inlined_call_operand.vmem [shape: bf16[2,144,64], index: 1, kind: input, shape index: {}]
  %s2 = inlined_call_operand.vmem [shape: f32[1,64], index: 2, kind: input, shape index: {}]
  %s3 = inlined_call_operand.hbm [shape: bf16[2,8,64], index: 3, kind: output, shape index: {}]
  %s4 = sld [smem:[#allocation0]]
  $region45: #{tpu_custom_call.1} parent=0
    _
  %s6 = ssub.s32 1, %s4
  %s7 = scalar_select 0, %s6, %s4
  $region1: #{tpu_custom_call.1} parent=0
    #allocation2 [shape = 'u8[4096]{0}', space=vmem, size = 0x1000, scoped, tag = 'output window, operand 0']
    #allocation3 [shape = 's32[2]{0}', space=sflag, size = 0x8, scoped, tag = 'scoped memory for tpu_custom_call.1']
    %8 = vsyncpa [#allocation3], 0
    %s9 = scalar_lea.sflag [#allocation3], 1
    %10 = vsyncpa %s9, 0
    loop: start=0, step=1, limit=4
    $region2: #{tpu_custom_call.1} parent=1 // loop_pre_header
      _
    $region3: #{tpu_custom_call.1} parent=1 // loop_header
      %s12 = sphi 0, %s16
      %p13 = scmp.ge.s32.totalorder %s12, 4
      %s19 = sphi 0, %s31
      %s20 = sphi 0, %s27
      %s21 = sphi 0, %s19
      %s22 = sphi 0, %s20
      %s23 = sphi 0, %s21
      %s24 = sphi 0, %s22
      %s34 = sphi 0, %s36
      %s37 = sphi 0, %s34
      %s38 = sphi 0, %s37
      %s54 = sphi 0, %s38
      %s58 = sphi 0, %s58
      %s60 = sphi 0, %s58
      %s61 = sphi 0, %s60
      %s75 = sphi 0, %s61
      %s79 = sphi 0, %s79
      %s81 = sphi 0, %s79
      %s82 = sphi 0, %s81
      %s96 = sphi 0, %s82
      %s104 = sphi 0, %s106
      %s107 = sphi 0, %s104
      %s108 = sphi 0, %s107
      %s124 = sphi 0, %s108
    $region4: #{tpu_custom_call.1} parent=1 // loop_header_branch
      %15 = sbr.rel (%p13) target = $region8
    $region5: #{tpu_custom_call.1} parent=1 // loop_body
      %s17 = ssub.s32 %s12, 1
      %s18 = ssub.s32 %s12, 2
      %s25 = sadd.s32 1, %s20
      %p26 = scmp.ge.s32.totalorder %s25, 1
      %s27 = scalar_select %p26, 0, %s25
      %s28 = sadd.s32 1, %s19
      %s29 = scalar_select %p26, %s28, %s19
      %p30 = scmp.ge.s32.totalorder %s29, 2
      %s31 = scalar_select %p30, 0, %s29
      %s32 = ssub.s32 %s19, %s31
      %p33 = scmp.eq.s32.totalorder %s32, 0
      %s35 = sadd.s32 %s34, 1
      %s36 = scalar_select %p33, %s34, %s35
      %p39 = pneg %p33
      %p40 = scmp.eq.s32.totalorder %s12, 1
      %p41 = por %p39, %p40
      %p42 = scmp.ne.s32.totalorder %s34, %s37
      %p43 = scmp.eq.s32.totalorder %s12, 0
      %p44 = por %p42, %p43
      %p45 = scmp.ne.s32.totalorder %s34, %s37
      %p46 = scmp.eq.s32.totalorder %s17, 1
      %p47 = por %p45, %p46
      %p48 = scmp.ne.s32.totalorder %s37, %s38
      %p49 = scmp.eq.s32.totalorder %s17, 0
      %p50 = por %p48, %p49
      %p51 = scmp.ne.s32.totalorder %s37, %s38
      %p52 = scmp.eq.s32.totalorder %s18, 1
      %p53 = por %p51, %p52
      %p55 = scmp.ne.s32.totalorder %s38, %s54
      %p56 = scmp.eq.s32.totalorder %s18, 0
      %p57 = por %p55, %p56
      %s59 = sadd.s32 %s58, 1
      %p62 = scmp.eq.s32.totalorder %s12, 1
      %p63 = scmp.ne.s32.totalorder %s58, %s60
      %p64 = scmp.eq.s32.totalorder %s12, 0
      %p65 = por %p63, %p64
      %p66 = scmp.ne.s32.totalorder %s58, %s60
      %p67 = scmp.eq.s32.totalorder %s17, 1
      %p68 = por %p66, %p67
      %p69 = scmp.ne.s32.totalorder %s60, %s61
      %p70 = scmp.eq.s32.totalorder %s17, 0
      %p71 = por %p69, %p70
      %p72 = scmp.ne.s32.totalorder %s60, %s61
      %p73 = scmp.eq.s32.totalorder %s18, 1
      %p74 = por %p72, %p73
      %p76 = scmp.ne.s32.totalorder %s61, %s75
      %p77 = scmp.eq.s32.totalorder %s18, 0
      %p78 = por %p76, %p77
      %s80 = sadd.s32 %s79, 1
      %p83 = scmp.eq.s32.totalorder %s12, 1
      %p84 = scmp.ne.s32.totalorder %s79, %s81
      %p85 = scmp.eq.s32.totalorder %s12, 0
      %p86 = por %p84, %p85
      %p87 = scmp.ne.s32.totalorder %s79, %s81
      %p88 = scmp.eq.s32.totalorder %s17, 1
      %p89 = por %p87, %p88
      %p90 = scmp.ne.s32.totalorder %s81, %s82
      %p91 = scmp.eq.s32.totalorder %s17, 0
      %p92 = por %p90, %p91
      %p93 = scmp.ne.s32.totalorder %s81, %s82
      %p94 = scmp.eq.s32.totalorder %s18, 1
      %p95 = por %p93, %p94
      %p97 = scmp.ne.s32.totalorder %s82, %s96
      %p98 = scmp.eq.s32.totalorder %s18, 0
      %p99 = por %p97, %p98
      %s100 = ssub.s32 %s19, %s31
      %s101 = ssub.s32 %s20, %s27
      %s102 = sor.u32 %s100, %s101
      %p103 = scmp.eq.s32.totalorder %s102, 0
      %s105 = sadd.s32 %s104, 1
      %s106 = scalar_select %p103, %s104, %s105
      %p109 = pneg %p103
      %p110 = scmp.eq.s32.totalorder %s12, 1
      %p111 = por %p109, %p110
      %p112 = scmp.ne.s32.totalorder %s104, %s107
      %p113 = scmp.eq.s32.totalorder %s12, 0
      %p114 = por %p112, %p113
      %p115 = scmp.ne.s32.totalorder %s104, %s107
      %p116 = scmp.eq.s32.totalorder %s17, 1
      %p117 = por %p115, %p116
      %p118 = scmp.ne.s32.totalorder %s107, %s108
      %p119 = scmp.eq.s32.totalorder %s17, 0
      %p120 = por %p118, %p119
      %p121 = scmp.ne.s32.totalorder %s107, %s108
      %p122 = scmp.eq.s32.totalorder %s18, 1
      %p123 = por %p121, %p122
      %p125 = scmp.ne.s32.totalorder %s108, %s124
      %p126 = scmp.eq.s32.totalorder %s18, 0
      %p127 = por %p125, %p126
      %p128 = scmp.le.s32.totalorder 1, %s12
      %p129 = scmp.lt.s32.totalorder %s12, 3
      %p130 = pnand %p128, %p129
      %p131 = pneg %p130
      // Predicated region
      $region9: #{tpu_custom_call.1} parent=5 // pred_check
        _
      $region10: #{tpu_custom_call.1} parent=5 // pred_check_branch
        %133 = sbr.rel (%p130) target = $region12
      $region11: #{tpu_custom_call.1} parent=5 // pred_region
        %s134 = ssub.s32 %s12, 1
        // Predicated region
        $region13: #{tpu_custom_call.1} parent=11 // pred_check
          %p135 = pneg %p71
        $region14: #{tpu_custom_call.1} parent=11 // pred_check_branch
          %137 = sbr.rel (%p135) target = $region16
        $region15: #{tpu_custom_call.1} parent=11 // pred_region
          _
        $region16: #{tpu_custom_call.1} parent=11 // pred_fallthru
          _
        // Predicated region
        $region17: #{tpu_custom_call.1} parent=11 // pred_check
          %p138 = pneg %p92
        $region18: #{tpu_custom_call.1} parent=11 // pred_check_branch
          %140 = sbr.rel (%p138) target = $region20
        $region19: #{tpu_custom_call.1} parent=11 // pred_region
          _
        $region20: #{tpu_custom_call.1} parent=11 // pred_fallthru
          _
      $region12: #{tpu_custom_call.1} parent=5 // pred_fallthru
        _
      %p141 = scmp.lt.s32.totalorder %s12, 2
      // Predicated region
      $region21: #{tpu_custom_call.1} parent=5 // pred_check
        %p142 = pneg %p141
      $region22: #{tpu_custom_call.1} parent=5 // pred_check_branch
        %144 = sbr.rel (%p142) target = $region24
      $region23: #{tpu_custom_call.1} parent=5 // pred_region
        // Predicated region
        $region25: #{tpu_custom_call.1} parent=23 // pred_check
          %p145 = pneg %p44
        $region26: #{tpu_custom_call.1} parent=23 // pred_check_branch
          %147 = sbr.rel (%p145) target = $region28
        $region27: #{tpu_custom_call.1} parent=23 // pred_region
          %p148 = scmp.lt.s32.totalorder %s19, 1
          %s149 = scalar_select %p148, %s19, 1
          %s150 = smul.addr %s149, 4
          %s151 = smul.addr %s150, 4
          %s152 = scalar_lea.vmem %s0, %s151
        $region28: #{tpu_custom_call.1} parent=23 // pred_fallthru
          _
      $region24: #{tpu_custom_call.1} parent=5 // pred_fallthru
        _
      %p153 = scmp.le.s32.totalorder 1, %s12
      %p154 = scmp.lt.s32.totalorder %s12, 3
      %p155 = pnand %p153, %p154
      %p156 = pneg %p155
      // Predicated region
      $region29: #{tpu_custom_call.1} parent=5 // pred_check
        _
      $region30: #{tpu_custom_call.1} parent=5 // pred_check_branch
        %158 = sbr.rel (%p155) target = $region32
      $region31: #{tpu_custom_call.1} parent=5 // pred_region
        %s159 = ssub.s32 %s12, 1
        %p160 = scmp.lt.s32.totalorder %s21, 1
        %s161 = scalar_select %p160, %s21, 1
        %s162 = smul.addr %s161, 4
        %s163 = smul.addr %s162, 4
        %s164 = scalar_lea.vmem %s0, %s163
        %p165 = pneg %p50
        %p166 = pneg %p47
        %p167 = pneg %p71
        %p168 = pneg %p68
        %p169 = pneg %p92
        %p170 = pneg %p89
        %p171 = pneg %p120
        %p172 = pneg %p117
        %s173 = sand.u32 %s107, 1
        %s174 = scalar_lea.sflag [#allocation3], %s173
        %s175 = sand.u32 %s107, 1
        %s176 = smul.addr %s175, 4
        %s177 = scalar_lea.vmem [#allocation2], %s176
        %p178 = scmp.lt.s32.totalorder %s21, 1
        %s179 = scalar_select %p178, %s21, 1
        %s180 = smul.addr %s179, 4
        %s181 = smul.addr %s180, 4
        %s182 = scalar_lea.vmem %s0, %s181
        %v184 = vld [vmem:[%s182] sm:$0xff]
        %v185 = vld [vmem:[%s1] sm:$0xf]
        %v186 = vld [vmem:[%s1 + $0x4] sm:$0xf]
        %v187 = vld [vmem:[%s1 + $0x8] sm:$0xf]
        %v188 = vld [vmem:[%s1 + $0xc] sm:$0xf]
        %v189 = vld [vmem:[%s1 + $0x10] sm:$0xf]
        %v190 = vld [vmem:[%s1 + $0x14] sm:$0xf]
        %v191 = vld [vmem:[%s1 + $0x18] sm:$0xf]
        %v192 = vld [vmem:[%s1 + $0x1c] sm:$0xf]
        %v193 = vld [vmem:[%s1 + $0x20] sm:$0xf]
        %v194 = vld [vmem:[%s1 + $0x24] sm:$0xf]
        %v195 = vld [vmem:[%s1 + $0x28] sm:$0xf]
        %v196 = vld [vmem:[%s1 + $0x2c] sm:$0xf]
        %v197 = vld [vmem:[%s1 + $0x30] sm:$0xf]
        %v198 = vld [vmem:[%s1 + $0x34] sm:$0xf]
        %v199 = vld [vmem:[%s1 + $0x38] sm:$0xf]
        %v200 = vld [vmem:[%s1 + $0x3c] sm:$0xf]
        %v201 = vld [vmem:[%s1 + $0x40] sm:$0xf]
        %v202 = vld [vmem:[%s1 + $0x44] sm:$0xf]
        %v203 = vld [vmem:[%s182 + $0x8] sm:$0x11]
        %s204 = scalar_lea.vmem %s1, 72
        %v205 = vld [vmem:[%s204] sm:$0xf]
        %v206 = vld [vmem:[%s204 + $0x4] sm:$0xf]
        %v207 = vld [vmem:[%s204 + $0x8] sm:$0xf]
        %v208 = vld [vmem:[%s204 + $0xc] sm:$0xf]
        %v209 = vld [vmem:[%s204 + $0x10] sm:$0xf]
        %v210 = vld [vmem:[%s204 + $0x14] sm:$0xf]
        %v211 = vld [vmem:[%s204 + $0x18] sm:$0xf]
        %v212 = vld [vmem:[%s204 + $0x1c] sm:$0xf]
        %v213 = vld [vmem:[%s204 + $0x20] sm:$0xf]
        %v214 = vld [vmem:[%s204 + $0x24] sm:$0xf]
        %v215 = vld [vmem:[%s204 + $0x28] sm:$0xf]
        %v216 = vld [vmem:[%s204 + $0x2c] sm:$0xf]
        %v217 = vld [vmem:[%s204 + $0x30] sm:$0xf]
        %v218 = vld [vmem:[%s204 + $0x34] sm:$0xf]
        %v219 = vld [vmem:[%s204 + $0x38] sm:$0xf]
        %v220 = vld [vmem:[%s204 + $0x3c] sm:$0xf]
        %v221 = vld [vmem:[%s204 + $0x40] sm:$0xf]
        %v222 = vld [vmem:[%s204 + $0x44] sm:$0xf]
        %v225 = vunpack.c.l.b16 %v184
        %v226 = vunpack.c.h.b16 %v184
        %v227 = vunpack.c.l.b16 %v203
        %v228 = vunpack.c.h.b16 %v203
        %v229 = vpack.c.b16 %v227, %v225
        %v230 = vpack.c.b16 %v228, %v226
        %v232 = vshrl.u32 %v229, 16
        %v234 = vshll.u32 %v229, 16
        %v236 = vrot.slane %v234, 1
        %v237 = vor.u32 %v232, %v236
        %v239 = vshrl.u32 %v230, 16
        %v241 = vshll.u32 %v230, 16
        %v243 = vrot.slane %v241, 1
        %v244 = vor.u32 %v239, %v243
        %v264 = vunpack.c.l.b16 %v205
        %v265 = vunpack.c.l.b16 %v206
        %v266 = vunpack.c.l.b16 %v207
        %v267 = vunpack.c.l.b16 %v208
        %v268 = vunpack.c.l.b16 %v209
        %v269 = vunpack.c.l.b16 %v210
        %v270 = vunpack.c.l.b16 %v211
        %v271 = vunpack.c.l.b16 %v212
        %v272 = vunpack.c.l.b16 %v213
        %v273 = vunpack.c.l.b16 %v214
        %v274 = vunpack.c.l.b16 %v215
        %v275 = vunpack.c.l.b16 %v216
        %v276 = vunpack.c.l.b16 %v217
        %v277 = vunpack.c.l.b16 %v218
        %v278 = vunpack.c.l.b16 %v219
        %v279 = vunpack.c.l.b16 %v220
        %v280 = vunpack.c.l.b16 %v221
        %v281 = vunpack.c.l.b16 %v222
        %v282 = vpack.c.b16 %v265, %v264
        %v283 = vpack.c.b16 %v267, %v266
        %v284 = vpack.c.b16 %v269, %v268
        %v285 = vpack.c.b16 %v271, %v270
        %v286 = vpack.c.b16 %v273, %v272
        %v287 = vpack.c.b16 %v275, %v274
        %v288 = vpack.c.b16 %v277, %v276
        %v289 = vpack.c.b16 %v279, %v278
        %v290 = vpack.c.b16 %v281, %v280
        %vm300 = vcmask 130048
        %v302 = vsel %vm300, %v244, 0
        %304 = vmatprep.subr.bf16.mxu0 0
        %305 = vmatpush1.bf16.msra.mxu0 %v282
        %306 = vmatprep.subr.bf16.mxu0 0
        %307 = vmatpush1.bf16.msra.mxu0 %v283
        %308 = vmatprep.subr.bf16.mxu0 0
        %309 = vmatpush1.bf16.msra.mxu0 %v284
        %310 = vmatprep.subr.bf16.mxu0 0
        %311 = vmatpush1.bf16.msra.mxu0 %v285
        %312 = vmatprep.subr.bf16.mxu0 0
        %313 = vmatpush1.bf16.msra.mxu0 %v286
        %314 = vmatprep.subr.bf16.mxu0 0
        %315 = vmatpush1.bf16.msra.mxu0 %v287
        %316 = vmatprep.subr.bf16.mxu0 0
        %317 = vmatpush1.bf16.msra.mxu0 %v288
        %318 = vmatprep.subr.bf16.mxu0 0
        %319 = vmatpush1.bf16.msra.mxu0 %v289
        %320 = vmatprep.subr.bf16.mxu0 0
        %321 = vmatpush1.bf16.msra.mxu0 %v290
        %322 = vmatprep.subr.bf16.mxu0 0
        %323 = vmatpush1.bf16.msra.mxu0 0
        %324 = vmatprep.subr.bf16.mxu0 0
        %325 = vmatpush1.bf16.msra.mxu0 0
        %326 = vmatprep.subr.bf16.mxu0 0
        %327 = vmatpush1.bf16.msra.mxu0 0
        %328 = vmatprep.subr.bf16.mxu0 0
        %329 = vmatpush1.bf16.msra.mxu0 0
        %330 = vmatprep.subr.bf16.mxu0 0
        %331 = vmatpush1.bf16.msra.mxu0 0
        %332 = vmatprep.subr.bf16.mxu0 0
        %333 = vmatpush1.bf16.msra.mxu0 0
        %334 = vmatprep.subr.bf16.mxu0 0
        %335 = vmatpush1.bf16.msra.mxu0 0
        %336 = vmatprep.mubr.bf16.mxu0 %v302
        %337 = vmatmul.mubr.bf16.gmra.mrb[0].mxu0 %v237
        %v338 = vpop.f32.mrb[0].mxu0
        %v339 = vadd.f32 0.0, %v338
        %v340 = vpop.f32.mrb[0].mxu0
        %v341 = vpop.f32.mrb[0].mxu0
        %v342 = vpop.f32.mrb[0].mxu0
        %343 = vdwg.mxu0
        %v344 = vpack.c.b16 %v225, %v225
        %v345 = vpack.c.b16 %v226, %v226
        %v365 = vunpack.c.l.b16 %v185
        %v366 = vunpack.c.l.b16 %v186
        %v367 = vunpack.c.l.b16 %v187
        %v368 = vunpack.c.l.b16 %v188
        %v369 = vunpack.c.l.b16 %v189
        %v370 = vunpack.c.l.b16 %v190
        %v371 = vunpack.c.l.b16 %v191
        %v372 = vunpack.c.l.b16 %v192
        %v373 = vunpack.c.l.b16 %v193
        %v374 = vunpack.c.l.b16 %v194
        %v375 = vunpack.c.l.b16 %v195
        %v376 = vunpack.c.l.b16 %v196
        %v377 = vunpack.c.l.b16 %v197
        %v378 = vunpack.c.l.b16 %v198
        %v379 = vunpack.c.l.b16 %v199
        %v380 = vunpack.c.l.b16 %v200
        %v381 = vunpack.c.l.b16 %v201
        %v382 = vunpack.c.l.b16 %v202
        %v383 = vpack.c.b16 %v366, %v365
        %v384 = vpack.c.b16 %v368, %v367
        %v385 = vpack.c.b16 %v370, %v369
        %v386 = vpack.c.b16 %v372, %v371
        %v387 = vpack.c.b16 %v374, %v373
        %v388 = vpack.c.b16 %v376, %v375
        %v389 = vpack.c.b16 %v378, %v377
        %v390 = vpack.c.b16 %v380, %v379
        %v391 = vpack.c.b16 %v382, %v381
        %v402 = vsel %vm300, %v345, 0
        %404 = vmatprep.subr.bf16.mxu0 0
        %405 = vmatpush1.bf16.msra.mxu0 %v383
        %406 = vmatprep.subr.bf16.mxu0 0
        %407 = vmatpush1.bf16.msra.mxu0 %v384
        %408 = vmatprep.subr.bf16.mxu0 0
        %409 = vmatpush1.bf16.msra.mxu0 %v385
        %410 = vmatprep.subr.bf16.mxu0 0
        %411 = vmatpush1.bf16.msra.mxu0 %v386
        %412 = vmatprep.subr.bf16.mxu0 0
        %413 = vmatpush1.bf16.msra.mxu0 %v387
        %414 = vmatprep.subr.bf16.mxu0 0
        %415 = vmatpush1.bf16.msra.mxu0 %v388
        %416 = vmatprep.subr.bf16.mxu0 0
        %417 = vmatpush1.bf16.msra.mxu0 %v389
        %418 = vmatprep.subr.bf16.mxu0 0
        %419 = vmatpush1.bf16.msra.mxu0 %v390
        %420 = vmatprep.subr.bf16.mxu0 0
        %421 = vmatpush1.bf16.msra.mxu0 %v391
        %422 = vmatprep.subr.bf16.mxu0 0
        %423 = vmatpush1.bf16.msra.mxu0 0
        %424 = vmatprep.subr.bf16.mxu0 0
        %425 = vmatpush1.bf16.msra.mxu0 0
        %426 = vmatprep.subr.bf16.mxu0 0
        %427 = vmatpush1.bf16.msra.mxu0 0
        %428 = vmatprep.subr.bf16.mxu0 0
        %429 = vmatpush1.bf16.msra.mxu0 0
        %430 = vmatprep.subr.bf16.mxu0 0
        %431 = vmatpush1.bf16.msra.mxu0 0
        %432 = vmatprep.subr.bf16.mxu0 0
        %433 = vmatpush1.bf16.msra.mxu0 0
        %434 = vmatprep.subr.bf16.mxu0 0
        %435 = vmatpush1.bf16.msra.mxu0 0
        %436 = vmatprep.mubr.bf16.mxu0 %v402
        %437 = vmatmul.mubr.bf16.gmra.mrb[0].mxu0 %v344
        %v438 = vpop.f32.mrb[0].mxu0
        %v439 = vadd.f32 %v339, %v438
        %v440 = vpop.f32.mrb[0].mxu0
        %v441 = vpop.f32.mrb[0].mxu0
        %v442 = vpop.f32.mrb[0].mxu0
        %443 = vdwg.mxu0
        %v444 = vld [vmem:[%s2] sm:$0x1]
        %v446 = vlaneseq
        %v447 = vshrl.u32 %v446, 7
        %v448 = vsub.s32 0, %v447
        %v449 = vrot.slane %v444, %v448
        %v451 = vadd.f32 %v439, %v449
        %v452 = vmax.f32 %v451, 0.0
        %v453 = vpack.c.bf16 %v452, %v452
        %vm454 = vcmask 519168
        %455 = vst.msk [vmem:[%s177] sm:$0xf] %vm454, %v453
        %s456 = sand.u32 %s107, 1
        %s457 = scalar_lea.sflag [#allocation3], %s456
        %s458 = sand.u32 %s107, 1
        %s459 = smul.addr %s458, 4
        %s460 = scalar_lea.vmem [#allocation2], %s459
        // Predicated region
        $region33: #{tpu_custom_call.1} parent=31 // pred_check
          %p461 = pneg %p117
        $region34: #{tpu_custom_call.1} parent=31 // pred_check_branch
          %463 = sbr.rel (%p461) target = $region36
        $region35: #{tpu_custom_call.1} parent=31 // pred_region
          %s465 = ssub.s32 64, 64
          %466 = vsyncadd %s457, %s465
          %s467 = sadd.s32 %s22, %s21
          %s468 = smul.addr %s467, 64
          %s469 = scalar_lea.hbm %s3, %s468
          %s471 = sshll.u32 %s460, 4
          %s472 = int_to_ptr.vmem [resolvable:$true] %s471
          %474 = dma.vmem_to_hbm [thread:$0]  %s472, 64, %s469, %s457
        $region36: #{tpu_custom_call.1} parent=31 // pred_fallthru
          _
      $region32: #{tpu_custom_call.1} parent=5 // pred_fallthru
        _
      %p475 = scmp.le.s32.totalorder 2, %s12
      // Predicated region
      $region37: #{tpu_custom_call.1} parent=5 // pred_check
        %p476 = pneg %p475
      $region38: #{tpu_custom_call.1} parent=5 // pred_check_branch
        %478 = sbr.rel (%p476) target = $region40
      $region39: #{tpu_custom_call.1} parent=5 // pred_region
        %s479 = ssub.s32 %s12, 2
        // Predicated region
        $region41: #{tpu_custom_call.1} parent=39 // pred_check
          %p480 = pneg %p123
        $region42: #{tpu_custom_call.1} parent=39 // pred_check_branch
          %482 = sbr.rel (%p480) target = $region44
        $region43: #{tpu_custom_call.1} parent=39 // pred_region
          %s483 = sand.u32 %s108, 1
          %s484 = scalar_lea.sflag [#allocation3], %s483
          %s485 = sand.u32 %s108, 1
          %s486 = smul.addr %s485, 4
          %s487 = scalar_lea.vmem [#allocation2], %s486
          %488 = dma.done %s484, 64
        $region44: #{tpu_custom_call.1} parent=39 // pred_fallthru
          _
      $region40: #{tpu_custom_call.1} parent=5 // pred_fallthru
        _
    $region6: #{tpu_custom_call.1} parent=1 // loop_footer
      %s16 = sadd.s32 1, %s12
    $region7: #{tpu_custom_call.1} parent=1 // loop_footer_branch
      %11 = sbr.rel target = $region3
    $region8: #{tpu_custom_call.1} parent=1 // loop_exit
      _
    %489 = vsyncpa [#allocation3], 1
    %s490 = scalar_lea.sflag [#allocation3], 1
    %491 = vsyncpa %s490, 1

// kernel: tpu_custom_call.1
$region0: #{tpu_custom_call.1}
  #allocation0 [shape = 'u32[]', space=smem, size = 0x4, offset = 0x4, fixed_abs, tag = 'smem constant byte address 0x4 - core index']
  #allocation1 [shape = 'u32[144,128]{1,0:T(1,128)}', space=vmem, size = 0x12000, scoped, tag = 'internal scratch']
  %s0 = inlined_call_operand.vmem [shape: bf16[2,9,144], index: 0, kind: input, shape index: {}]
  %s1 = inlined_call_operand.vmem [shape: bf16[2,144,64], index: 1, kind: input, shape index: {}]
  %s2 = inlined_call_operand.vmem [shape: f32[1,64], index: 2, kind: input, shape index: {}]
  %s3 = inlined_call_operand.hbm [shape: bf16[2,8,64], index: 3, kind: output, shape index: {}]
  %s4 = sld [smem:[#allocation0]]
  $region45: #{tpu_custom_call.1} parent=0
    _
  %s6 = ssub.s32 1, %s4
  %s7 = scalar_select 0, %s6, %s4
  $region1: #{tpu_custom_call.1} parent=0
    #allocation2 [shape = 'u8[4096]{0}', space=vmem, size = 0x1000, scoped, tag = 'output window, operand 0']
    #allocation3 [shape = 's32[2]{0}', space=sflag, size = 0x8, scoped, tag = 'scoped memory for tpu_custom_call.1']
    %8 = vsyncpa [#allocation3], 0
    %s9 = scalar_lea.sflag [#allocation3], 1
    %10 = vsyncpa %s9, 0
    loop: start=0, step=1, limit=4
    $region2: #{tpu_custom_call.1} parent=1 // loop_pre_header
      _
    $region3: #{tpu_custom_call.1} parent=1 // loop_header
      %s12 = sphi 0, %s16
      %p13 = scmp.ge.s32.totalorder %s12, 4
      %s19 = sphi 0, %s31
      %s20 = sphi 0, %s27
      %s21 = sphi 0, %s19
      %s22 = sphi 0, %s20
      %s23 = sphi 0, %s21
      %s24 = sphi 0, %s22
      %s34 = sphi 0, %s36
      %s37 = sphi 0, %s34
      %s38 = sphi 0, %s37
      %s54 = sphi 0, %s38
      %s58 = sphi 0, %s58
      %s60 = sphi 0, %s58
      %s61 = sphi 0, %s60
      %s75 = sphi 0, %s61
      %s79 = sphi 0, %s79
      %s81 = sphi 0, %s79
      %s82 = sphi 0, %s81
      %s96 = sphi 0, %s82
      %s104 = sphi 0, %s106
      %s107 = sphi 0, %s104
      %s108 = sphi 0, %s107
      %s124 = sphi 0, %s108
    $region4: #{tpu_custom_call.1} parent=1 // loop_header_branch
      %15 = sbr.rel (%p13) target = $region8
    $region5: #{tpu_custom_call.1} parent=1 // loop_body
      %s17 = ssub.s32 %s12, 1
      %s18 = ssub.s32 %s12, 2
      %s25 = sadd.s32 1, %s20
      %p26 = scmp.ge.s32.totalorder %s25, 1
      %s27 = scalar_select %p26, 0, %s25
      %s28 = sadd.s32 1, %s19
      %s29 = scalar_select %p26, %s28, %s19
      %p30 = scmp.ge.s32.totalorder %s29, 2
      %s31 = scalar_select %p30, 0, %s29
      %s32 = ssub.s32 %s19, %s31
      %p33 = scmp.eq.s32.totalorder %s32, 0
      %s35 = sadd.s32 %s34, 1
      %s36 = scalar_select %p33, %s34, %s35
      %p39 = pneg %p33
      %p40 = scmp.eq.s32.totalorder %s12, 1
      %p41 = por %p39, %p40
      %p42 = scmp.ne.s32.totalorder %s34, %s37
      %p43 = scmp.eq.s32.totalorder %s12, 0
      %p44 = por %p42, %p43
      %p45 = scmp.ne.s32.totalorder %s34, %s37
      %p46 = scmp.eq.s32.totalorder %s17, 1
      %p47 = por %p45, %p46
      %p48 = scmp.ne.s32.totalorder %s37, %s38
      %p49 = scmp.eq.s32.totalorder %s17, 0
      %p50 = por %p48, %p49
      %p51 = scmp.ne.s32.totalorder %s37, %s38
      %p52 = scmp.eq.s32.totalorder %s18, 1
      %p53 = por %p51, %p52
      %p55 = scmp.ne.s32.totalorder %s38, %s54
      %p56 = scmp.eq.s32.totalorder %s18, 0
      %p57 = por %p55, %p56
      %s59 = sadd.s32 %s58, 1
      %p62 = scmp.eq.s32.totalorder %s12, 1
      %p63 = scmp.ne.s32.totalorder %s58, %s60
      %p64 = scmp.eq.s32.totalorder %s12, 0
      %p65 = por %p63, %p64
      %p66 = scmp.ne.s32.totalorder %s58, %s60
      %p67 = scmp.eq.s32.totalorder %s17, 1
      %p68 = por %p66, %p67
      %p69 = scmp.ne.s32.totalorder %s60, %s61
      %p70 = scmp.eq.s32.totalorder %s17, 0
      %p71 = por %p69, %p70
      %p72 = scmp.ne.s32.totalorder %s60, %s61
      %p73 = scmp.eq.s32.totalorder %s18, 1
      %p74 = por %p72, %p73
      %p76 = scmp.ne.s32.totalorder %s61, %s75
      %p77 = scmp.eq.s32.totalorder %s18, 0
      %p78 = por %p76, %p77
      %s80 = sadd.s32 %s79, 1
      %p83 = scmp.eq.s32.totalorder %s12, 1
      %p84 = scmp.ne.s32.totalorder %s79, %s81
      %p85 = scmp.eq.s32.totalorder %s12, 0
      %p86 = por %p84, %p85
      %p87 = scmp.ne.s32.totalorder %s79, %s81
      %p88 = scmp.eq.s32.totalorder %s17, 1
      %p89 = por %p87, %p88
      %p90 = scmp.ne.s32.totalorder %s81, %s82
      %p91 = scmp.eq.s32.totalorder %s17, 0
      %p92 = por %p90, %p91
      %p93 = scmp.ne.s32.totalorder %s81, %s82
      %p94 = scmp.eq.s32.totalorder %s18, 1
      %p95 = por %p93, %p94
      %p97 = scmp.ne.s32.totalorder %s82, %s96
      %p98 = scmp.eq.s32.totalorder %s18, 0
      %p99 = por %p97, %p98
      %s100 = ssub.s32 %s19, %s31
      %s101 = ssub.s32 %s20, %s27
      %s102 = sor.u32 %s100, %s101
      %p103 = scmp.eq.s32.totalorder %s102, 0
      %s105 = sadd.s32 %s104, 1
      %s106 = scalar_select %p103, %s104, %s105
      %p109 = pneg %p103
      %p110 = scmp.eq.s32.totalorder %s12, 1
      %p111 = por %p109, %p110
      %p112 = scmp.ne.s32.totalorder %s104, %s107
      %p113 = scmp.eq.s32.totalorder %s12, 0
      %p114 = por %p112, %p113
      %p115 = scmp.ne.s32.totalorder %s104, %s107
      %p116 = scmp.eq.s32.totalorder %s17, 1
      %p117 = por %p115, %p116
      %p118 = scmp.ne.s32.totalorder %s107, %s108
      %p119 = scmp.eq.s32.totalorder %s17, 0
      %p120 = por %p118, %p119
      %p121 = scmp.ne.s32.totalorder %s107, %s108
      %p122 = scmp.eq.s32.totalorder %s18, 1
      %p123 = por %p121, %p122
      %p125 = scmp.ne.s32.totalorder %s108, %s124
      %p126 = scmp.eq.s32.totalorder %s18, 0
      %p127 = por %p125, %p126
      %p128 = scmp.le.s32.totalorder 1, %s12
      %p129 = scmp.lt.s32.totalorder %s12, 3
      %p130 = pnand %p128, %p129
      %p131 = pneg %p130
      // Predicated region
      $region9: #{tpu_custom_call.1} parent=5 // pred_check
        _
      $region10: #{tpu_custom_call.1} parent=5 // pred_check_branch
        %133 = sbr.rel (%p130) target = $region12
      $region11: #{tpu_custom_call.1} parent=5 // pred_region
        %s134 = ssub.s32 %s12, 1
        // Predicated region
        $region13: #{tpu_custom_call.1} parent=11 // pred_check
          %p135 = pneg %p71
        $region14: #{tpu_custom_call.1} parent=11 // pred_check_branch
          %137 = sbr.rel (%p135) target = $region16
        $region15: #{tpu_custom_call.1} parent=11 // pred_region
          _
        $region16: #{tpu_custom_call.1} parent=11 // pred_fallthru
          _
        // Predicated region
        $region17: #{tpu_custom_call.1} parent=11 // pred_check
          %p138 = pneg %p92
        $region18: #{tpu_custom_call.1} parent=11 // pred_check_branch
          %140 = sbr.rel (%p138) target = $region20
        $region19: #{tpu_custom_call.1} parent=11 // pred_region
          _
        $region20: #{tpu_custom_call.1} parent=11 // pred_fallthru
          _
      $region12: #{tpu_custom_call.1} parent=5 // pred_fallthru
        _
      %p141 = scmp.lt.s32.totalorder %s12, 2
      // Predicated region
      $region21: #{tpu_custom_call.1} parent=5 // pred_check
        %p142 = pneg %p141
      $region22: #{tpu_custom_call.1} parent=5 // pred_check_branch
        %144 = sbr.rel (%p142) target = $region24
      $region23: #{tpu_custom_call.1} parent=5 // pred_region
        // Predicated region
        $region25: #{tpu_custom_call.1} parent=23 // pred_check
          %p145 = pneg %p44
        $region26: #{tpu_custom_call.1} parent=23 // pred_check_branch
          %147 = sbr.rel (%p145) target = $region28
        $region27: #{tpu_custom_call.1} parent=23 // pred_region
          %p148 = scmp.lt.s32.totalorder %s19, 1
          %s149 = scalar_select %p148, %s19, 1
          %s150 = smul.addr %s149, 4
          %s151 = smul.addr %s150, 4
          %s152 = scalar_lea.vmem %s0, %s151
        $region28: #{tpu_custom_call.1} parent=23 // pred_fallthru
          _
      $region24: #{tpu_custom_call.1} parent=5 // pred_fallthru
        _
      %p153 = scmp.le.s32.totalorder 1, %s12
      %p154 = scmp.lt.s32.totalorder %s12, 3
      %p155 = pnand %p153, %p154
      %p156 = pneg %p155
      // Predicated region
      $region29: #{tpu_custom_call.1} parent=5 // pred_check
        _
      $region30: #{tpu_custom_call.1} parent=5 // pred_check_branch
        %158 = sbr.rel (%p155) target = $region32
      $region31: #{tpu_custom_call.1} parent=5 // pred_region
        %s159 = ssub.s32 %s12, 1
        %p160 = scmp.lt.s32.totalorder %s21, 1
        %s161 = scalar_select %p160, %s21, 1
        %s162 = smul.addr %s161, 4
        %s163 = smul.addr %s162, 4
        %s164 = scalar_lea.vmem %s0, %s163
        %p165 = pneg %p50
        %p166 = pneg %p47
        %p167 = pneg %p71
        %p168 = pneg %p68
        %p169 = pneg %p92
        %p170 = pneg %p89
        %p171 = pneg %p120
        %p172 = pneg %p117
        %s173 = sand.u32 %s107, 1
        %s174 = scalar_lea.sflag [#allocation3], %s173
        %s175 = sand.u32 %s107, 1
        %s176 = smul.addr %s175, 4
        %s177 = scalar_lea.vmem [#allocation2], %s176
        %p178 = scmp.lt.s32.totalorder %s21, 1
        %s179 = scalar_select %p178, %s21, 1
        %s180 = smul.addr %s179, 4
        %s181 = smul.addr %s180, 4
        %s182 = scalar_lea.vmem %s0, %s181
        %v184 = vld [vmem:[%s182] sm:$0xff]
        %v185 = vld [vmem:[%s1] sm:$0xf]
        %v186 = vld [vmem:[%s1 + $0x4] sm:$0xf]
        %v187 = vld [vmem:[%s1 + $0x8] sm:$0xf]
        %v188 = vld [vmem:[%s1 + $0xc] sm:$0xf]
        %v189 = vld [vmem:[%s1 + $0x10] sm:$0xf]
        %v190 = vld [vmem:[%s1 + $0x14] sm:$0xf]
        %v191 = vld [vmem:[%s1 + $0x18] sm:$0xf]
        %v192 = vld [vmem:[%s1 + $0x1c] sm:$0xf]
        %v193 = vld [vmem:[%s1 + $0x20] sm:$0xf]
        %v194 = vld [vmem:[%s1 + $0x24] sm:$0xf]
        %v195 = vld [vmem:[%s1 + $0x28] sm:$0xf]
        %v196 = vld [vmem:[%s1 + $0x2c] sm:$0xf]
        %v197 = vld [vmem:[%s1 + $0x30] sm:$0xf]
        %v198 = vld [vmem:[%s1 + $0x34] sm:$0xf]
        %v199 = vld [vmem:[%s1 + $0x38] sm:$0xf]
        %v200 = vld [vmem:[%s1 + $0x3c] sm:$0xf]
        %v201 = vld [vmem:[%s1 + $0x40] sm:$0xf]
        %v202 = vld [vmem:[%s1 + $0x44] sm:$0xf]
        %v203 = vld [vmem:[%s182 + $0x8] sm:$0x11]
        %s204 = scalar_lea.vmem %s1, 72
        %v205 = vld [vmem:[%s204] sm:$0xf]
        %v206 = vld [vmem:[%s204 + $0x4] sm:$0xf]
        %v207 = vld [vmem:[%s204 + $0x8] sm:$0xf]
        %v208 = vld [vmem:[%s204 + $0xc] sm:$0xf]
        %v209 = vld [vmem:[%s204 + $0x10] sm:$0xf]
        %v210 = vld [vmem:[%s204 + $0x14] sm:$0xf]
        %v211 = vld [vmem:[%s204 + $0x18] sm:$0xf]
        %v212 = vld [vmem:[%s204 + $0x1c] sm:$0xf]
        %v213 = vld [vmem:[%s204 + $0x20] sm:$0xf]
        %v214 = vld [vmem:[%s204 + $0x24] sm:$0xf]
        %v215 = vld [vmem:[%s204 + $0x28] sm:$0xf]
        %v216 = vld [vmem:[%s204 + $0x2c] sm:$0xf]
        %v217 = vld [vmem:[%s204 + $0x30] sm:$0xf]
        %v218 = vld [vmem:[%s204 + $0x34] sm:$0xf]
        %v219 = vld [vmem:[%s204 + $0x38] sm:$0xf]
        %v220 = vld [vmem:[%s204 + $0x3c] sm:$0xf]
        %v221 = vld [vmem:[%s204 + $0x40] sm:$0xf]
        %v222 = vld [vmem:[%s204 + $0x44] sm:$0xf]
        %v225 = vunpack.c.l.b16 %v184
        %v226 = vunpack.c.h.b16 %v184
        %v227 = vunpack.c.l.b16 %v203
        %v228 = vunpack.c.h.b16 %v203
        %v229 = vpack.c.b16 %v227, %v225
        %v230 = vpack.c.b16 %v228, %v226
        %v232 = vshrl.u32 %v229, 16
        %v234 = vshll.u32 %v229, 16
        %v236 = vrot.slane %v234, 1
        %v237 = vor.u32 %v232, %v236
        %v239 = vshrl.u32 %v230, 16
        %v241 = vshll.u32 %v230, 16
        %v243 = vrot.slane %v241, 1
        %v244 = vor.u32 %v239, %v243
        %v264 = vunpack.c.l.b16 %v205
        %v265 = vunpack.c.l.b16 %v206
        %v266 = vunpack.c.l.b16 %v207
        %v267 = vunpack.c.l.b16 %v208
        %v268 = vunpack.c.l.b16 %v209
        %v269 = vunpack.c.l.b16 %v210
        %v270 = vunpack.c.l.b16 %v211
        %v271 = vunpack.c.l.b16 %v212
        %v272 = vunpack.c.l.b16 %v213
        %v273 = vunpack.c.l.b16 %v214
        %v274 = vunpack.c.l.b16 %v215
        %v275 = vunpack.c.l.b16 %v216
        %v276 = vunpack.c.l.b16 %v217
        %v277 = vunpack.c.l.b16 %v218
        %v278 = vunpack.c.l.b16 %v219
        %v279 = vunpack.c.l.b16 %v220
        %v280 = vunpack.c.l.b16 %v221
        %v281 = vunpack.c.l.b16 %v222
        %v282 = vpack.c.b16 %v265, %v264
        %v283 = vpack.c.b16 %v267, %v266
        %v284 = vpack.c.b16 %v269, %v268
        %v285 = vpack.c.b16 %v271, %v270
        %v286 = vpack.c.b16 %v273, %v272
        %v287 = vpack.c.b16 %v275, %v274
        %v288 = vpack.c.b16 %v277, %v276
        %v289 = vpack.c.b16 %v279, %v278
        %v290 = vpack.c.b16 %v281, %v280
        %vm300 = vcmask 130048
        %v302 = vsel %vm300, %v244, 0
        %304 = vmatprep.subr.bf16.mxu0 0
        %305 = vmatpush1.bf16.msra.mxu0 %v282
        %306 = vmatprep.subr.bf16.mxu0 0
        %307 = vmatpush1.bf16.msra.mxu0 %v283
        %308 = vmatprep.subr.bf16.mxu0 0
        %309 = vmatpush1.bf16.msra.mxu0 %v284
        %310 = vmatprep.subr.bf16.mxu0 0
        %311 = vmatpush1.bf16.msra.mxu0 %v285
        %312 = vmatprep.subr.bf16.mxu0 0
        %313 = vmatpush1.bf16.msra.mxu0 %v286
        %314 = vmatprep.subr.bf16.mxu0 0
        %315 = vmatpush1.bf16.msra.mxu0 %v287
        %316 = vmatprep.subr.bf16.mxu0 0
        %317 = vmatpush1.bf16.msra.mxu0 %v288
        %318 = vmatprep.subr.bf16.mxu0 0
        %319 = vmatpush1.bf16.msra.mxu0 %v289
        %320 = vmatprep.subr.bf16.mxu0 0
        %321 = vmatpush1.bf16.msra.mxu0 %v290
        %322 = vmatprep.subr.bf16.mxu0 0
        %323 = vmatpush1.bf16.msra.mxu0 0
        %324 = vmatprep.subr.bf16.mxu0 0
        %325 = vmatpush1.bf16.msra.mxu0 0
        %326 = vmatprep.subr.bf16.mxu0 0
        %327 = vmatpush1.bf16.msra.mxu0 0
        %328 = vmatprep.subr.bf16.mxu0 0
        %329 = vmatpush1.bf16.msra.mxu0 0
        %330 = vmatprep.subr.bf16.mxu0 0
        %331 = vmatpush1.bf16.msra.mxu0 0
        %332 = vmatprep.subr.bf16.mxu0 0
        %333 = vmatpush1.bf16.msra.mxu0 0
        %334 = vmatprep.subr.bf16.mxu0 0
        %335 = vmatpush1.bf16.msra.mxu0 0
        %336 = vmatprep.mubr.bf16.mxu0 %v302
        %337 = vmatmul.mubr.bf16.gmra.mrb[0].mxu0 %v237
        %v338 = vpop.f32.mrb[0].mxu0
        %v339 = vadd.f32 0.0, %v338
        %v340 = vpop.f32.mrb[0].mxu0
        %v341 = vpop.f32.mrb[0].mxu0
        %v342 = vpop.f32.mrb[0].mxu0
        %343 = vdwg.mxu0
        %v344 = vpack.c.b16 %v225, %v225
        %v345 = vpack.c.b16 %v226, %v226
        %v365 = vunpack.c.l.b16 %v185
        %v366 = vunpack.c.l.b16 %v186
        %v367 = vunpack.c.l.b16 %v187
        %v368 = vunpack.c.l.b16 %v188
        %v369 = vunpack.c.l.b16 %v189
        %v370 = vunpack.c.l.b16 %v190
        %v371 = vunpack.c.l.b16 %v191
        %v372 = vunpack.c.l.b16 %v192
        %v373 = vunpack.c.l.b16 %v193
        %v374 = vunpack.c.l.b16 %v194
        %v375 = vunpack.c.l.b16 %v195
        %v376 = vunpack.c.l.b16 %v196
        %v377 = vunpack.c.l.b16 %v197
        %v378 = vunpack.c.l.b16 %v198
        %v379 = vunpack.c.l.b16 %v199
        %v380 = vunpack.c.l.b16 %v200
        %v381 = vunpack.c.l.b16 %v201
        %v382 = vunpack.c.l.b16 %v202
        %v383 = vpack.c.b16 %v366, %v365
        %v384 = vpack.c.b16 %v368, %v367
        %v385 = vpack.c.b16 %v370, %v369
        %v386 = vpack.c.b16 %v372, %v371
        %v387 = vpack.c.b16 %v374, %v373
        %v388 = vpack.c.b16 %v376, %v375
        %v389 = vpack.c.b16 %v378, %v377
        %v390 = vpack.c.b16 %v380, %v379
        %v391 = vpack.c.b16 %v382, %v381
        %v402 = vsel %vm300, %v345, 0
        %404 = vmatprep.subr.bf16.mxu0 0
        %405 = vmatpush1.bf16.msra.mxu0 %v383
        %406 = vmatprep.subr.bf16.mxu0 0
        %407 = vmatpush1.bf16.msra.mxu0 %v384
        %408 = vmatprep.subr.bf16.mxu0 0
        %409 = vmatpush1.bf16.msra.mxu0 %v385
        %410 = vmatprep.subr.bf16.mxu0 0
        %411 = vmatpush1.bf16.msra.mxu0 %v386
        %412 = vmatprep.subr.bf16.mxu0 0
        %413 = vmatpush1.bf16.msra.mxu0 %v387
        %414 = vmatprep.subr.bf16.mxu0 0
        %415 = vmatpush1.bf16.msra.mxu0 %v388
        %416 = vmatprep.subr.bf16.mxu0 0
        %417 = vmatpush1.bf16.msra.mxu0 %v389
        %418 = vmatprep.subr.bf16.mxu0 0
        %419 = vmatpush1.bf16.msra.mxu0 %v390
        %420 = vmatprep.subr.bf16.mxu0 0
        %421 = vmatpush1.bf16.msra.mxu0 %v391
        %422 = vmatprep.subr.bf16.mxu0 0
        %423 = vmatpush1.bf16.msra.mxu0 0
        %424 = vmatprep.subr.bf16.mxu0 0
        %425 = vmatpush1.bf16.msra.mxu0 0
        %426 = vmatprep.subr.bf16.mxu0 0
        %427 = vmatpush1.bf16.msra.mxu0 0
        %428 = vmatprep.subr.bf16.mxu0 0
        %429 = vmatpush1.bf16.msra.mxu0 0
        %430 = vmatprep.subr.bf16.mxu0 0
        %431 = vmatpush1.bf16.msra.mxu0 0
        %432 = vmatprep.subr.bf16.mxu0 0
        %433 = vmatpush1.bf16.msra.mxu0 0
        %434 = vmatprep.subr.bf16.mxu0 0
        %435 = vmatpush1.bf16.msra.mxu0 0
        %436 = vmatprep.mubr.bf16.mxu0 %v402
        %437 = vmatmul.mubr.bf16.gmra.mrb[0].mxu0 %v344
        %v438 = vpop.f32.mrb[0].mxu0
        %v439 = vadd.f32 %v339, %v438
        %v440 = vpop.f32.mrb[0].mxu0
        %v441 = vpop.f32.mrb[0].mxu0
        %v442 = vpop.f32.mrb[0].mxu0
        %443 = vdwg.mxu0
        %v444 = vld [vmem:[%s2] sm:$0x1]
        %v446 = vlaneseq
        %v447 = vshrl.u32 %v446, 7
        %v448 = vsub.s32 0, %v447
        %v449 = vrot.slane %v444, %v448
        %v451 = vadd.f32 %v439, %v449
        %v452 = vmax.f32 %v451, 0.0
        %v453 = vpack.c.bf16 %v452, %v452
        %vm454 = vcmask 519168
        %455 = vst.msk [vmem:[%s177] sm:$0xf] %vm454, %v453
        %s456 = sand.u32 %s107, 1
        %s457 = scalar_lea.sflag [#allocation3], %s456
        %s458 = sand.u32 %s107, 1
        %s459 = smul.addr %s458, 4
        %s460 = scalar_lea.vmem [#allocation2], %s459
        // Predicated region
        $region33: #{tpu_custom_call.1} parent=31 // pred_check
          %p461 = pneg %p117
        $region34: #{tpu_custom_call.1} parent=31 // pred_check_branch
          %463 = sbr.rel (%p461) target = $region36
        $region35: #{tpu_custom_call.1} parent=31 // pred_region
          %s465 = ssub.s32 64, 64
          %466 = vsyncadd %s457, %s465
          %s467 = sadd.s32 %s22, %s21
          %s468 = smul.addr %s467, 64
          %s469 = scalar_lea.hbm %s3, %s468
          %s471 = sshll.u32 %s460, 4
          %s472 = int_to_ptr.vmem [resolvable:$true] %s471
          %474 = dma.vmem_to_hbm [thread:$0]  %s472, 64, %s469, %s457
        $region36: #{tpu_custom_call.1} parent=31 // pred_fallthru
          _
      $region32: #{tpu_custom_call.1} parent=5 // pred_fallthru
        _
      %p475 = scmp.le.s32.totalorder 2, %s12
      // Predicated region
      $region37: #{tpu_custom_call.1} parent=5 // pred_check
        %p476 = pneg %p475
      $region38: #{tpu_custom_call.1} parent=5 // pred_check_branch
        %478 = sbr.rel (%p476) target = $region40
      $region39: #{tpu_custom_call.1} parent=5 // pred_region
        %s479 = ssub.s32 %s12, 2
        // Predicated region
        $region41: #{tpu_custom_call.1} parent=39 // pred_check
          %p480 = pneg %p123
        $region42: #{tpu_custom_call.1} parent=39 // pred_check_branch
          %482 = sbr.rel (%p480) target = $region44
        $region43: #{tpu_custom_call.1} parent=39 // pred_region
          %s483 = sand.u32 %s108, 1
          %s484 = scalar_lea.sflag [#allocation3], %s483
          %s485 = sand.u32 %s108, 1
          %s486 = smul.addr %s485, 4
          %s487 = scalar_lea.vmem [#allocation2], %s486
          %488 = dma.done %s484, 64
        $region44: #{tpu_custom_call.1} parent=39 // pred_fallthru
          _
      $region40: #{tpu_custom_call.1} parent=5 // pred_fallthru
        _
    $region6: #{tpu_custom_call.1} parent=1 // loop_footer
      %s16 = sadd.s32 1, %s12
    $region7: #{tpu_custom_call.1} parent=1 // loop_footer_branch
      %11 = sbr.rel target = $region3
    $region8: #{tpu_custom_call.1} parent=1 // loop_exit
      _
    %489 = vsyncpa [#allocation3], 1
    %s490 = scalar_lea.sflag [#allocation3], 1
    %491 = vsyncpa %s490, 1

</llo_original>
